<compile_context>
chip_gen: v7x
topology: tpu7x:2x2x1
jax: 0.10.0
libtpu: 0.0.40
codegen_flags: <defaults>
</compile_context>

<pallas_src>
import jax
import jax.numpy as jnp
from jax.experimental import pallas as pl
from jax.experimental.pallas import tpu as pltpu

_LANE = 128      # lane width (last-dim tiling unit)
_SUBLANE = 8     # sublane width (second-to-last-dim tiling unit, f32)


def _round_up(x, m):
    return ((x + m - 1) // m) * m


def fuse_predictor_params(w_cov, b_cov, w_mean, b_mean):
    """Fuse the two torch-layout (out, in) Linear layers into one MXU-ready operand pair.

    Call ONCE per parameter set (outside the per-step hot path).

    Returns:
      w_fused: (num_in, out_pad)  transposed; columns [0:a_out] = W_cov.T,
               [a_out:a_out+b_out] = W_mean.T, remaining columns zero (lane padding to 128).
      b_fused: (1, out_pad)       matching fused bias row.
    """
    a_out, _num_in = w_cov.shape
    b_out = w_mean.shape[0]
    out = a_out + b_out
    out_pad = _round_up(out, _LANE)

    w_fused = jnp.concatenate([w_cov, w_mean], axis=0).T            # (num_in, out)
    w_fused = jnp.pad(w_fused, ((0, 0), (0, out_pad - out)))        # (num_in, out_pad)
    b_fused = jnp.concatenate([b_cov, b_mean], axis=0)              # (out,)
    b_fused = jnp.pad(b_fused, (0, out_pad - out)).reshape(1, out_pad)
    return w_fused, b_fused


def _predictor_kernel(x_ref, w_ref, b_ref, oa_ref, ob_ref):
    # One fused MXU matmul per row tile: (TILE_N, K) @ (K, OUT_PAD) -> (TILE_N, OUT_PAD),
    # f32 accumulation, a single bias broadcast-add, then two compact column stores.
    a_out = oa_ref.shape[-1]
    b_out = ob_ref.shape[-1]
    r = jnp.dot(x_ref[...], w_ref[...], preferred_element_type=jnp.float32) + b_ref[...]
    oa_ref[...] = r[:, :a_out].astype(oa_ref.dtype)
    ob_ref[...] = r[:, a_out:a_out + b_out].astype(ob_ref.dtype)


def linear_predictor_forward(x, w_fused, b_fused, a_shape, b_shape, *,
                             tile_n=1024, min_rows_for_pallas=1024):
    """x: (N, num_in); w_fused/b_fused from fuse_predictor_params.

    Returns (a_tch, b_tch) with shapes (N, a_shape[0], a_shape[1]) and (N, b_shape[0]).
    """
    N, num_in = x.shape
    a_out = a_shape[0] * a_shape[1]
    b_out = b_shape[0]
    assert a_out + b_out <= w_fused.shape[1]
    assert w_fused.shape[0] == num_in

    if N < min_rows_for_pallas:
        # Small-N fast path: a 20-wide GEMV fuses in plain XLA essentially for free;
        # fixed pallas_call dispatch overhead would dominate at these sizes.
        out = x @ w_fused[:, :a_out + b_out] + b_fused[0, :a_out + b_out]
        a_tch = out[:, :a_out].reshape(N, a_shape[0], a_shape[1])
        b_tch = out[:, a_out:a_out + b_out].reshape(N, b_out)
        return a_tch, b_tch

    # Row-tile the batch.  Cap the tile at half the rows (sublane-rounded) so the grid
    # has >= 2 steps (v7x megacore), then pad N so the grid divides evenly; padded rows
    # produce bias-only outputs that are sliced away below.
    n_rows = _round_up(N, _SUBLANE)
    half = _round_up(pl.cdiv(n_rows, 2), _SUBLANE)
    tile_n = max(_SUBLANE, min(tile_n, half, n_rows))
    n_pad = _round_up(N, tile_n)
    if n_pad != N:
        x = jnp.pad(x, ((0, n_pad - N), (0, 0)))

    out_a, out_b = pl.pallas_call(
        _predictor_kernel,
        out_shape=(
            jax.ShapeDtypeStruct((n_pad, a_out), x.dtype),
            jax.ShapeDtypeStruct((n_pad, b_out), x.dtype),
        ),
        grid=(n_pad // tile_n,),
        in_specs=[
            pl.BlockSpec((tile_n, num_in), lambda i: (i, 0)),   # streamed x row tiles
            pl.BlockSpec(w_fused.shape, lambda i: (0, 0)),      # VMEM-resident fused weights
            pl.BlockSpec(b_fused.shape, lambda i: (0, 0)),      # VMEM-resident fused bias row
        ],
        out_specs=(
            pl.BlockSpec((tile_n, a_out), lambda i: (i, 0)),    # compact a output (N, 16)
            pl.BlockSpec((tile_n, b_out), lambda i: (i, 0)),    # compact b output (N, 4)
        ),
        compiler_params=pltpu.CompilerParams(
            dimension_semantics=("parallel",),   # batch axis shards across TCs on v7x
        ),
    )(x, w_fused, b_fused)

    a_tch = out_a[:N].reshape(N, a_shape[0], a_shape[1])
    b_tch = out_b[:N]
    # TODO(synk): knn_cov blending (sklearn kneighbors + scipy sqrtm) has no Pallas equivalent.
    return a_tch, b_tch


if __name__ == "__main__":
    # Small shapes consistent with the module:
    #   num_in = 32 context features, a_shape = (4, 4) -> a_out = 16, b_shape = (4,) -> b_out = 4
    batch, num_in = 2, 32
    a_shape = (4, 4)
    b_shape = (4,)
    a_out = a_shape[0] * a_shape[1]
    b_out = b_shape[0]

    key = jax.random.PRNGKey(0)
    kx, kwc, kbc, kwm, kbm, kx2 = jax.random.split(key, 6)
    x = jax.random.normal(kx, (batch, num_in), dtype=jnp.float32)
    # torch nn.Linear layout: weight (out, in), bias (out,)
    w_cov = jax.random.normal(kwc, (a_out, num_in), dtype=jnp.float32) * 0.1
    b_cov = jax.random.normal(kbc, (a_out,), dtype=jnp.float32)        # ~ a_tch.flatten()
    w_mean = jax.random.normal(kwm, (b_out, num_in), dtype=jnp.float32) * 0.1
    b_mean = jax.random.normal(kbm, (b_out,), dtype=jnp.float32)       # ~ b_tch

    # One-time parameter fusion (not in the per-call hot path).
    w_fused, b_fused = fuse_predictor_params(w_cov, b_cov, w_mean, b_mean)
    w_fused, b_fused = jax.block_until_ready((w_fused, b_fused))

    def ref(xv):
        ra = (xv @ w_cov.T + b_cov).reshape(xv.shape[0], *a_shape)
        rb = (xv @ w_mean.T + b_mean).reshape(xv.shape[0], b_shape[0])
        return ra, rb

    # 1) Pallas path forced at the small demo batch.
    a_tch, b_tch = linear_predictor_forward(
        x, w_fused, b_fused, a_shape, b_shape, min_rows_for_pallas=0)
    jax.block_until_ready((a_tch, b_tch))
    ra, rb = ref(x)
    assert a_tch.shape == (batch, a_shape[0], a_shape[1])
    assert b_tch.shape == (batch, b_shape[0])
    assert jnp.allclose(a_tch, ra, atol=1e-5), "a_tch mismatch (pallas, N=2)"
    assert jnp.allclose(b_tch, rb, atol=1e-5), "b_tch mismatch (pallas, N=2)"

    # 2) Pallas path at a batch that exercises row padding and a >= 2-step grid.
    x2 = jax.random.normal(kx2, (100, num_in), dtype=jnp.float32)
    a2, b2 = linear_predictor_forward(
        x2, w_fused, b_fused, a_shape, b_shape, tile_n=64, min_rows_for_pallas=0)
    jax.block_until_ready((a2, b2))
    ra2, rb2 = ref(x2)
    assert jnp.allclose(a2, ra2, atol=1e-5), "a_tch mismatch (pallas, N=100)"
    assert jnp.allclose(b2, rb2, atol=1e-5), "b_tch mismatch (pallas, N=100)"

    # 3) Small-N XLA fast path (default threshold) matches the reference too.
    a3, b3 = linear_predictor_forward(x, w_fused, b_fused, a_shape, b_shape)
    jax.block_until_ready((a3, b3))
    assert jnp.allclose(a3, ra, atol=1e-5), "a_tch mismatch (fast path)"
    assert jnp.allclose(b3, rb, atol=1e-5), "b_tch mismatch (fast path)"

    print("KERNEL_OK")
</pallas_src>

<mosaic_0001>
module attributes {stable_mosaic.version = 11 : i64} {
  func.func @_predictor_kernel(%arg0: i32, %arg1: memref<8x32xf32, #tpu.memory_space<vmem>>, %arg2: memref<32x128xf32, #tpu.memory_space<vmem>>, %arg3: memref<1x128xf32, #tpu.memory_space<vmem>>, %arg4: memref<8x16xf32, #tpu.memory_space<vmem>>, %arg5: memref<8x4xf32, #tpu.memory_space<vmem>>) attributes {dimension_semantics = [#tpu.dimension_semantics<parallel>], iteration_bounds = array<i64: 1>, scalar_prefetch = 0 : i64, scratch_operands = 0 : i64, tpu.core_type = #tpu.core_type<tc>, window_params = [{transform_indices = @transform_0, window_bounds = array<i64: 8, 32>}, {pipeline_mode = #tpu.pipeline_mode<synchronous>, transform_indices = @transform_1, window_bounds = array<i64: 32, 128>}, {pipeline_mode = #tpu.pipeline_mode<synchronous>, transform_indices = @transform_2, window_bounds = array<i64: 1, 128>}, {transform_indices = @transform_3, window_bounds = array<i64: 8, 16>}, {transform_indices = @transform_4, window_bounds = array<i64: 8, 4>}]} {
    %c0 = arith.constant 0 : index
    %c0_0 = arith.constant 0 : index
    %0 = vector.load %arg1[%c0, %c0_0] : memref<8x32xf32, #tpu.memory_space<vmem>>, vector<8x32xf32>
    %c0_1 = arith.constant 0 : index
    %c0_2 = arith.constant 0 : index
    %1 = vector.load %arg2[%c0_1, %c0_2] : memref<32x128xf32, #tpu.memory_space<vmem>>, vector<32x128xf32>
    %cst = arith.constant dense<0.000000e+00> : vector<8x128xf32>
    %2 = tpu.matmul %0, %1, %cst {dimension_numbers = #tpu.dot_dimension_numbers<[1], [0], [0], [1], [0, 0, 1, 1], [], []>} : vector<8x32xf32>, vector<32x128xf32>, vector<8x128xf32> -> vector<8x128xf32>
    %c0_3 = arith.constant 0 : index
    %c0_4 = arith.constant 0 : index
    %3 = vector.load %arg3[%c0_3, %c0_4] : memref<1x128xf32, #tpu.memory_space<vmem>>, vector<1x128xf32>
    %4 = vector.broadcast %3 : vector<1x128xf32> to vector<8x128xf32>
    %5 = arith.addf %2, %4 : vector<8x128xf32>
    %6 = vector.extract_strided_slice %5 {offsets = [0, 0], sizes = [8, 16], strides = [1, 1]} : vector<8x128xf32> to vector<8x16xf32>
    %c0_5 = arith.constant 0 : index
    %c0_6 = arith.constant 0 : index
    %7 = vector.load %arg4[%c0_5, %c0_6] : memref<8x16xf32, #tpu.memory_space<vmem>>, vector<8x16xf32>
    tpu.vector_store %arg4[%c0_5, %c0_6], %6 {strides = array<i32>} : memref<8x16xf32, #tpu.memory_space<vmem>>, vector<8x16xf32>,
    %8 = vector.extract_strided_slice %5 {offsets = [0, 16], sizes = [8, 4], strides = [1, 1]} : vector<8x128xf32> to vector<8x4xf32>
    %c0_7 = arith.constant 0 : index
    %c0_8 = arith.constant 0 : index
    %9 = vector.load %arg5[%c0_7, %c0_8] : memref<8x4xf32, #tpu.memory_space<vmem>>, vector<8x4xf32>
    tpu.vector_store %arg5[%c0_7, %c0_8], %8 {strides = array<i32>} : memref<8x4xf32, #tpu.memory_space<vmem>>, vector<8x4xf32>,
    return
  }
  func.func @transform_0(%arg0: i32) -> (i32, i32) {
    %c0_i32 = arith.constant 0 : i32
    %c0_i32_0 = arith.constant 0 : i32
    return %arg0, %c0_i32 : i32, i32
  }
  func.func @transform_1(%arg0: i32) -> (i32, i32) {
    %c0_i32 = arith.constant 0 : i32
    %c0_i32_0 = arith.constant 0 : i32
    %c0_i32_1 = arith.constant 0 : i32
    return %c0_i32, %c0_i32_0 : i32, i32
  }
  func.func @transform_2(%arg0: i32) -> (i32, i32) {
    %c0_i32 = arith.constant 0 : i32
    %c0_i32_0 = arith.constant 0 : i32
    %c0_i32_1 = arith.constant 0 : i32
    return %c0_i32, %c0_i32_0 : i32, i32
  }
  func.func @transform_3(%arg0: i32) -> (i32, i32) {
    %c0_i32 = arith.constant 0 : i32
    %c0_i32_0 = arith.constant 0 : i32
    return %arg0, %c0_i32 : i32, i32
  }
  func.func @transform_4(%arg0: i32) -> (i32, i32) {
    %c0_i32 = arith.constant 0 : i32
    %c0_i32_0 = arith.constant 0 : i32
    return %arg0, %c0_i32 : i32, i32
  }
}

</mosaic_0001>

<llo_original>
// kernel: tpu_custom_call.1
$region0: #{tpu_custom_call.1}
  #allocation0 [shape = 'u32[]', space=smem, size = 0x4, offset = 0x4, fixed_abs, tag = 'smem constant byte address 0x4 - core index']
  #allocation1 [shape = 'u32[144,128]{1,0:T(1,128)}', space=vmem, size = 0x12000, scoped, tag = 'internal scratch']
  %s0 = inlined_call_operand.hbm [shape: f32[8,32], index: 0, kind: input, shape index: {}]
  %s1 = inlined_call_operand.hbm [shape: f32[32,128], index: 1, kind: input, shape index: {}]
  %s2 = inlined_call_operand.vmem [shape: f32[1,128], index: 2, kind: input, shape index: {}]
  %s3 = inlined_call_operand.hbm [shape: f32[8,16], index: 3, kind: output, shape index: {0}]
  %s4 = inlined_call_operand.vmem [shape: f32[8,4], index: 4, kind: output, shape index: {1}]
  %5 = xla_tuple %s3, %s4
  %s6 = sld [smem:[#allocation0]]
  $region38: #{tpu_custom_call.1} parent=0
    _
  %s8 = ssub.s32 1, %s6
  %s9 = scalar_select 0, %s8, %s6
  $region1: #{tpu_custom_call.1} parent=0
    #allocation2 [shape = 'u8[4096]{0}', space=vmem, size = 0x1000, scoped, tag = 'input window, operand 0, single buffered']
    #allocation3 [shape = 's32[1]{0}', space=sflag, size = 0x4, scoped, tag = 'scoped memory for tpu_custom_call.1']
    #allocation4 [shape = 's32[1]{0}', space=sflag, size = 0x4, scoped, tag = 'scoped memory for tpu_custom_call.1']
    #allocation5 [shape = 'u8[16384]{0}', space=vmem, size = 0x4000, scoped, tag = 'input window, operand 1, single buffered']
    #allocation6 [shape = 's32[1]{0}', space=sflag, size = 0x4, scoped, tag = 'scoped memory for tpu_custom_call.1']
    #allocation7 [shape = 'u8[4096]{0}', space=vmem, size = 0x1000, scoped, tag = 'output window, operand 0, single buffered']
    %10 = vsyncpa [#allocation3], 0
    %11 = vsyncpa [#allocation6], 0
    %12 = vsyncpa [#allocation4], 0
    // Predicated region
    $region2: #{tpu_custom_call.1} parent=1 // pred_check
      _
    $region3: #{tpu_custom_call.1} parent=1 // pred_check_branch
      %14 = sbr.rel (0) target = $region5
    $region4: #{tpu_custom_call.1} parent=1 // pred_region
      %s16 = ssub.s32 128, 128
      %17 = vsyncadd [#allocation3], %s16
      %s19 = sshll.u32 [#allocation2], 4
      %s20 = int_to_ptr.vmem [resolvable:$true] %s19
      %22 = dma.hbm_to_vmem [thread:$0]  %s0, 128, %s20, [#allocation3]
    $region5: #{tpu_custom_call.1} parent=1 // pred_fallthru
      _
    // Predicated region
    $region6: #{tpu_custom_call.1} parent=1 // pred_check
      _
    $region7: #{tpu_custom_call.1} parent=1 // pred_check_branch
      %24 = sbr.rel (0) target = $region9
    $region8: #{tpu_custom_call.1} parent=1 // pred_region
      %s26 = ssub.s32 512, 512
      %27 = vsyncadd [#allocation6], %s26
      %s28 = sshll.u32 [#allocation5], 4
      %s29 = int_to_ptr.vmem [resolvable:$true] %s28
      %34 = dma.hbm_to_vmem [thread:$0]  %s1, 512, %s29, [#allocation6], 128, 128, 8
    $region9: #{tpu_custom_call.1} parent=1 // pred_fallthru
      _
    // Predicated region
    $region10: #{tpu_custom_call.1} parent=1 // pred_check
      _
    $region11: #{tpu_custom_call.1} parent=1 // pred_check_branch
      %36 = sbr.rel (0) target = $region13
    $region12: #{tpu_custom_call.1} parent=1 // pred_region
      _
    $region13: #{tpu_custom_call.1} parent=1 // pred_fallthru
      _
    // Predicated region
    $region14: #{tpu_custom_call.1} parent=1 // pred_check
      _
    $region15: #{tpu_custom_call.1} parent=1 // pred_check_branch
      %38 = sbr.rel (0) target = $region17
    $region16: #{tpu_custom_call.1} parent=1 // pred_region
      %39 = dma.done [#allocation3], 128
    $region17: #{tpu_custom_call.1} parent=1 // pred_fallthru
      _
    // Predicated region
    $region18: #{tpu_custom_call.1} parent=1 // pred_check
      _
    $region19: #{tpu_custom_call.1} parent=1 // pred_check_branch
      %41 = sbr.rel (0) target = $region21
    $region20: #{tpu_custom_call.1} parent=1 // pred_region
      %42 = dma.done [#allocation6], 512
    $region21: #{tpu_custom_call.1} parent=1 // pred_fallthru
      _
    %v43 = vld [vmem:[#allocation2] sm:$0xff]
    %v44 = vld [vmem:[#allocation5] sm:$0xff]
    %v45 = vld [vmem:[#allocation5 + $0x8] sm:$0xff]
    %v46 = vld [vmem:[#allocation5 + $0x10] sm:$0xff]
    %v47 = vld [vmem:[#allocation5 + $0x18] sm:$0xff]
    %v48 = vld [vmem:[%s2] sm:$0x1]
    %v50 = vlaneseq
    %v51 = vshrl.u32 %v50, 7
    %v52 = vsub.s32 0, %v51
    %v53 = vrot.slane %v48, %v52
    %vm55 = vcmask 261120
    %v57 = vsel %vm55, %v43, 0
    %59 = vmatprep.subr.mxu0 0.0
    %60 = vmatpush1.msra.mxu0 %v44
    %61 = vmatprep.subr.mxu0 0.0
    %62 = vmatpush1.msra.mxu0 %v45
    %63 = vmatprep.subr.mxu0 0.0
    %64 = vmatpush1.msra.mxu0 %v46
    %65 = vmatprep.subr.mxu0 0.0
    %66 = vmatpush1.msra.mxu0 %v47
    %67 = vmatprep.subr.mxu0 0.0
    %68 = vmatpush1.msra.mxu0 0.0
    %69 = vmatprep.subr.mxu0 0.0
    %70 = vmatpush1.msra.mxu0 0.0
    %71 = vmatprep.subr.mxu0 0.0
    %72 = vmatpush1.msra.mxu0 0.0
    %73 = vmatprep.subr.mxu0 0.0
    %74 = vmatpush1.msra.mxu0 0.0
    %75 = vmatprep.subr.mxu0 0.0
    %76 = vmatpush1.msra.mxu0 0.0
    %77 = vmatprep.subr.mxu0 0.0
    %78 = vmatpush1.msra.mxu0 0.0
    %79 = vmatprep.subr.mxu0 0.0
    %80 = vmatpush1.msra.mxu0 0.0
    %81 = vmatprep.subr.mxu0 0.0
    %82 = vmatpush1.msra.mxu0 0.0
    %83 = vmatprep.subr.mxu0 0.0
    %84 = vmatpush1.msra.mxu0 0.0
    %85 = vmatprep.subr.mxu0 0.0
    %86 = vmatpush1.msra.mxu0 0.0
    %87 = vmatprep.subr.mxu0 0.0
    %88 = vmatpush1.msra.mxu0 0.0
    %89 = vmatprep.subr.mxu0 0.0
    %90 = vmatpush1.msra.mxu0 0.0
    %91 = vmatprep.subr.mxu0 0.0
    %92 = vmatpush1.msra.mxu0 0.0
    %93 = vmatprep.subr.mxu0 0.0
    %94 = vmatpush1.msra.mxu0 0.0
    %95 = vmatprep.subr.mxu0 0.0
    %96 = vmatpush1.msra.mxu0 0.0
    %97 = vmatprep.subr.mxu0 0.0
    %98 = vmatpush1.msra.mxu0 0.0
    %99 = vmatprep.subr.mxu0 0.0
    %100 = vmatpush1.msra.mxu0 0.0
    %101 = vmatprep.subr.mxu0 0.0
    %102 = vmatpush1.msra.mxu0 0.0
    %103 = vmatprep.subr.mxu0 0.0
    %104 = vmatpush1.msra.mxu0 0.0
    %105 = vmatprep.subr.mxu0 0.0
    %106 = vmatpush1.msra.mxu0 0.0
    %107 = vmatprep.subr.mxu0 0.0
    %108 = vmatpush1.msra.mxu0 0.0
    %109 = vmatprep.subr.mxu0 0.0
    %110 = vmatpush1.msra.mxu0 0.0
    %111 = vmatprep.subr.mxu0 0.0
    %112 = vmatpush1.msra.mxu0 0.0
    %113 = vmatprep.subr.mxu0 0.0
    %114 = vmatpush1.msra.mxu0 0.0
    %115 = vmatprep.subr.mxu0 0.0
    %116 = vmatpush1.msra.mxu0 0.0
    %117 = vmatprep.subr.mxu0 0.0
    %118 = vmatpush1.msra.mxu0 0.0
    %119 = vmatprep.subr.mxu0 0.0
    %120 = vmatpush1.msra.mxu0 0.0
    %121 = vmatprep.subr.mxu0 0.0
    %122 = vmatpush1.msra.mxu0 0.0
    %123 = vmatprep.mubr.f32.mxu0 0.0
    %124 = vmatmul.mubr.f32.gmra.mrb[0].mxu0 %v57
    %v125 = vpop.f32.mrb[0].mxu0
    %v126 = vadd.f32 %v53, %v125
    %v127 = vpop.f32.mrb[0].mxu0
    %128 = vdwg.mxu0
    %vm129 = vcmask 130048
    %130 = vst.msk [vmem:[#allocation7] sm:$0xff] %vm129, %v126
    %132 = vrot.lane.b32.xlu0 %v126, 112
    %v133 = vpop.permute.xlu0 %132
    %vm135 = vcmask 31744
    %136 = vst.msk [vmem:[%s4] sm:$0xff] %vm135, %v133
    // Predicated region
    $region22: #{tpu_custom_call.1} parent=1 // pred_check
      _
    $region23: #{tpu_custom_call.1} parent=1 // pred_check_branch
      %138 = sbr.rel (0) target = $region25
    $region24: #{tpu_custom_call.1} parent=1 // pred_region
      %s140 = ssub.s32 128, 128
      %141 = vsyncadd [#allocation4], %s140
      %s143 = sshll.u32 [#allocation7], 4
      %s144 = int_to_ptr.vmem [resolvable:$true] %s143
      %146 = dma.vmem_to_hbm [thread:$0]  %s144, 128, %s3, [#allocation4]
    $region25: #{tpu_custom_call.1} parent=1 // pred_fallthru
      _
    // Predicated region
    $region26: #{tpu_custom_call.1} parent=1 // pred_check
      _
    $region27: #{tpu_custom_call.1} parent=1 // pred_check_branch
      %148 = sbr.rel (0) target = $region29
    $region28: #{tpu_custom_call.1} parent=1 // pred_region
      _
    $region29: #{tpu_custom_call.1} parent=1 // pred_fallthru
      _
    // Predicated region
    $region30: #{tpu_custom_call.1} parent=1 // pred_check
      _
    $region31: #{tpu_custom_call.1} parent=1 // pred_check_branch
      %150 = sbr.rel (0) target = $region33
    $region32: #{tpu_custom_call.1} parent=1 // pred_region
      %151 = dma.done [#allocation4], 128
    $region33: #{tpu_custom_call.1} parent=1 // pred_fallthru
      _
    // Predicated region
    $region34: #{tpu_custom_call.1} parent=1 // pred_check
      _
    $region35: #{tpu_custom_call.1} parent=1 // pred_check_branch
      %153 = sbr.rel (0) target = $region37
    $region36: #{tpu_custom_call.1} parent=1 // pred_region
      _
    $region37: #{tpu_custom_call.1} parent=1 // pred_fallthru
      _
    %154 = vsyncpa [#allocation3], 1
    %155 = vsyncpa [#allocation6], 1
    %156 = vsyncpa [#allocation4], 1

</llo_original>
